<compile_context>
chip_gen: v7x
topology: tpu7x:2x2x1
jax: 0.10.0
libtpu: 0.0.40
codegen_flags: <defaults>
</compile_context>

<pallas_src>
import functools
import math

import jax
import jax.numpy as jnp
from jax.experimental import pallas as pl
from jax.experimental.pallas import tpu as pltpu


def _cdiv(a, b):
    return -(-a // b)


def _largest_divisor_leq(n, cap):
    cap = int(max(1, min(n, cap)))
    for d in range(cap, 0, -1):
        if n % d == 0:
            return d
    return 1


def _vmem_policy():
    """(per-step tile budget, vmem_limit_bytes, min grid steps) by TPU generation."""
    vmem_bytes = 64 * 1024 * 1024                      # conservative default: v7x per-TC
    try:
        info = pltpu.get_tpu_info()
        vmem_bytes = int(getattr(info, "vmem_capacity_bytes", vmem_bytes))
    except Exception:
        pass
    if vmem_bytes >= 100 * 1024 * 1024:                # v5e / v6e: 128 MiB physical VMEM
        return 24 * 1024 * 1024, 64 * 1024 * 1024, 1
    # v7x: 64 MiB per TensorCore, 2 TCs/chip -> modest footprint, feed both cores.
    return 14 * 1024 * 1024, 44 * 1024 * 1024, 2


def _choose_tiles(B, D, T, in_bytes, out_bytes, tile_t, budget, min_steps):
    """Pick (batch block bb, time tile tt, nb, nt) under a per-step VMEM budget."""
    LANE = 128
    # Double-buffered VMEM footprint per batch row:
    #   side streams: 2 x (bb, D, 1) f32 blocks, lane-padded to 128 lanes, x2 buffers
    side = 2 * 2 * D * LANE * 4
    #   x + out per time column, x2 buffers
    per_col = 2 * D * (in_bytes + out_bytes)

    avail = max(budget - side, per_col * LANE)
    fit = (avail // per_col) // LANE * LANE
    tt = max(LANE, min((int(tile_t) // LANE) * LANE, int(fit)))

    if T <= tt:
        tt = T                                         # full time extent: always legal
    else:
        # Prefer a 128-multiple tile that divides T so every store is an unmasked,
        # lane-dense vst (a partial last tile lowers to slower vst.msk stores).
        for cand in range(tt, LANE - 1, -LANE):
            if T % cand == 0:
                tt = cand
                break
    nt = _cdiv(T, tt)

    bb = 1
    if nt == 1:
        # Small-T workloads: block several batch rows per step to amortize the
        # ~0.35us/step grid overhead and keep the DMAs long.
        per_b = 2 * D * T * (in_bytes + out_bytes) + side
        bb = _largest_divisor_leq(B, budget // max(per_b, 1))
    nb = _cdiv(B, bb)

    # Guarantee enough grid steps to feed both v7x TensorCores.
    if nb * nt < min_steps:
        if bb > 1:
            bb = _largest_divisor_leq(B, max(1, B // min_steps))
            nb = _cdiv(B, bb)
        if nb * nt < min_steps and T >= min_steps * LANE:
            tt = max(LANE, ((T // min_steps) // LANE) * LANE)
            nt = _cdiv(T, tt)
    return bb, tt, nb, nt


# ---------------------------------------------------------------------------
# fused RMSNorm(channel) + FiLM:  out = g1 * rmsnorm(x) + beta,
# where g1 = (gamma + 1) * norm_scale was pre-folded in the wrapper.
# ---------------------------------------------------------------------------
def _scale_norm_kernel(x_ref, g1_ref, beta_ref, o_ref, *, eps, inv_d):
    # x_ref:    (bb, D, TT)  batch block x lane-dense time tile
    # g1_ref:   (bb, D, 1)   f32 (gamma + 1) * norm_scale, broadcast over Time
    # beta_ref: (bb, D, 1)   f32 FiLM beta
    x = x_ref[...]
    xf = x.astype(jnp.float32)
    ss = jnp.sum(xf * xf, axis=1, keepdims=True)       # (bb, 1, TT), XLU reduce
    normed = xf * jax.lax.rsqrt(ss * inv_d + eps)      # rsqrt lands on the EUP
    # torch parity: RMSNorm casts to x.dtype before the f32 affine terms.
    normed = normed.astype(x.dtype).astype(jnp.float32)
    # NOTE: a partial last Time tile may compute garbage in the padded columns
    # (they feed x*x / rsqrt) but the masked writeback discards them; the
    # reduction is over D, so padded lanes never leak into valid columns.
    o_ref[...] = (g1_ref[...] * normed + beta_ref[...]).astype(o_ref.dtype)


def scale_forward(x, norm_scale, conditions, cond_weight, cond_bias,
                  eps=1e-6, out_dtype=None, tile_t=4096):
    """x: [B, D, T]; norm_scale: [D]; conditions: [B, C];
    cond_weight: [C, 2D] (== torch Conv1d weight[:, :, 0].T); cond_bias: [2D]."""
    B, D, T = x.shape
    if out_dtype is None:
        # Bandwidth win: write back in the input dtype (halves write traffic for
        # bf16). Pass out_dtype=jnp.float32 for strict torch promotion parity.
        out_dtype = x.dtype

    # ---- conditioning projection + SiLU: tiny, leave to XLA (no kernel launch) ----
    z = (conditions.astype(jnp.float32) @ cond_weight.astype(jnp.float32)
         + cond_bias.astype(jnp.float32))
    gb = z * jax.nn.sigmoid(z)                         # SiLU
    betas = gb[:, :D].reshape(B, D, 1)                 # chunk(2, dim=1): betas first
    gammas = gb[:, D:].reshape(B, D, 1)
    # Fold the RMSNorm weight into the FiLM gamma: one fewer side stream + one
    # fewer per-element mul/add inside the kernel. O(B*D) wrapper cost.
    g1 = (gammas + 1.0) * norm_scale.reshape(1, D, 1).astype(jnp.float32)

    # ---- fused RMSNorm + FiLM, grid = (batch blocks, time tiles) ----
    in_bytes = jnp.dtype(x.dtype).itemsize
    out_bytes = jnp.dtype(out_dtype).itemsize
    budget, vmem_limit, min_steps = _vmem_policy()
    bb, tt, nb, nt = _choose_tiles(B, D, T, in_bytes, out_bytes, tile_t, budget,
                                   min_steps)

    kernel = functools.partial(_scale_norm_kernel, eps=float(eps), inv_d=1.0 / D)
    cost = pl.CostEstimate(
        flops=5 * B * D * T,
        transcendentals=B * T,
        bytes_accessed=B * D * T * (in_bytes + out_bytes) + 2 * B * D * 4,
    )

    # TODO(synk): if profiling shows exposed DMA latency at the chosen tile size,
    # add pipeline_mode=pl.Buffered(3) to the x / out BlockSpecs and re-sweep.
    return pl.pallas_call(
        kernel,
        out_shape=jax.ShapeDtypeStruct((B, D, T), out_dtype),
        grid=(nb, nt),
        in_specs=[
            pl.BlockSpec((bb, D, tt), lambda b, t: (b, 0, t)),
            pl.BlockSpec((bb, D, 1), lambda b, t: (b, 0, 0)),
            pl.BlockSpec((bb, D, 1), lambda b, t: (b, 0, 0)),
        ],
        out_specs=pl.BlockSpec((bb, D, tt), lambda b, t: (b, 0, t)),
        compiler_params=pltpu.CompilerParams(
            dimension_semantics=("parallel", "parallel"),
            vmem_limit_bytes=vmem_limit,
        ),
        cost_estimate=cost,
    )(x, g1, betas)


if __name__ == "__main__":
    B, D, T, C = 2, 32, 16, 8
    eps = 1e-6

    key = jax.random.PRNGKey(0)
    kx, kc, kw = jax.random.split(key, 3)
    x = jax.random.normal(kx, (B, D, T), dtype=jnp.float32)
    conditions = jax.random.normal(kc, (B, C), dtype=jnp.float32)

    # Deterministic parameters: non-trivial RMSNorm weight (exercises the fold);
    # Conv1d(k=1) weight via Kaiming-uniform (w_init_gain='relu'); bias zeros.
    norm_scale = jnp.linspace(0.5, 1.5, D, dtype=jnp.float32)
    bound = math.sqrt(6.0 / C)                          # sqrt(2) * sqrt(3 / fan_in)
    cond_weight = jax.random.uniform(kw, (C, 2 * D), minval=-bound, maxval=bound,
                                     dtype=jnp.float32)
    cond_bias = jnp.zeros((2 * D,), dtype=jnp.float32)

    out = scale_forward(x, norm_scale, conditions, cond_weight, cond_bias, eps=eps)
    out = jax.block_until_ready(out)

    # Pure-JAX reference (mirrors the torch module).
    xf = x.astype(jnp.float32)
    normed = xf * jax.lax.rsqrt(jnp.mean(xf * xf, axis=1, keepdims=True) + eps)
    normed = normed.astype(x.dtype).astype(jnp.float32) * norm_scale.reshape(1, D, 1)
    z = conditions @ cond_weight + cond_bias
    z = z / (1.0 + jnp.exp(-z))
    betas_ref = z[:, :D].reshape(B, D, 1)
    gammas_ref = z[:, D:].reshape(B, D, 1)
    ref = ((gammas_ref + 1.0) * normed + betas_ref).astype(out.dtype)

    assert out.shape == (B, D, T)
    err = float(jnp.max(jnp.abs(out - ref)))
    assert jnp.allclose(out, ref, atol=1e-5, rtol=1e-5), err
    print("KERNEL_OK")
</pallas_src>

<mosaic_0001>
module attributes {stable_mosaic.version = 11 : i64} {
  func.func @_scale_norm_kernel(%arg0: i32, %arg1: i32, %arg2: memref<1x32x16xf32, #tpu.memory_space<vmem>>, %arg3: memref<1x32x1xf32, #tpu.memory_space<vmem>>, %arg4: memref<1x32x1xf32, #tpu.memory_space<vmem>>, %arg5: memref<1x32x16xf32, #tpu.memory_space<vmem>>) attributes {dimension_semantics = [#tpu.dimension_semantics<parallel>, #tpu.dimension_semantics<parallel>], iteration_bounds = array<i64: 2, 1>, scalar_prefetch = 0 : i64, scratch_operands = 0 : i64, tpu.core_type = #tpu.core_type<tc>, window_params = [{transform_indices = @transform_0, window_bounds = array<i64: 1, 32, 16>}, {transform_indices = @transform_1, window_bounds = array<i64: 1, 32, 1>}, {transform_indices = @transform_2, window_bounds = array<i64: 1, 32, 1>}, {transform_indices = @transform_3, window_bounds = array<i64: 1, 32, 16>}]} {
    %c0 = arith.constant 0 : index
    %c0_0 = arith.constant 0 : index
    %c0_1 = arith.constant 0 : index
    %0 = vector.load %arg2[%c0, %c0_0, %c0_1] : memref<1x32x16xf32, #tpu.memory_space<vmem>>, vector<1x32x16xf32>
    %1 = arith.mulf %0, %0 : vector<1x32x16xf32>
    %cst = arith.constant dense<0.000000e+00> : vector<1x16xf32>
    %2 = vector.multi_reduction <add>, %1, %cst [1] : vector<1x32x16xf32> to vector<1x16xf32>
    %3 = vector.shape_cast %2 : vector<1x16xf32> to vector<1x1x16xf32>
    %cst_2 = arith.constant 3.125000e-02 : f32
    %4 = vector.broadcast %cst_2 : f32 to vector<1x1x16xf32>
    %5 = arith.mulf %3, %4 : vector<1x1x16xf32>
    %cst_3 = arith.constant 9.99999997E-7 : f32
    %6 = vector.broadcast %cst_3 : f32 to vector<1x1x16xf32>
    %7 = arith.addf %5, %6 : vector<1x1x16xf32>
    %8 = math.rsqrt %7 : vector<1x1x16xf32>
    %9 = vector.broadcast %8 : vector<1x1x16xf32> to vector<1x32x16xf32>
    %10 = arith.mulf %0, %9 : vector<1x32x16xf32>
    %c0_4 = arith.constant 0 : index
    %c0_5 = arith.constant 0 : index
    %c0_6 = arith.constant 0 : index
    %11 = vector.load %arg3[%c0_4, %c0_5, %c0_6] : memref<1x32x1xf32, #tpu.memory_space<vmem>>, vector<1x32x1xf32>
    %12 = vector.broadcast %11 : vector<1x32x1xf32> to vector<1x32x16xf32>
    %13 = arith.mulf %12, %10 : vector<1x32x16xf32>
    %c0_7 = arith.constant 0 : index
    %c0_8 = arith.constant 0 : index
    %c0_9 = arith.constant 0 : index
    %14 = vector.load %arg4[%c0_7, %c0_8, %c0_9] : memref<1x32x1xf32, #tpu.memory_space<vmem>>, vector<1x32x1xf32>
    %15 = vector.broadcast %14 : vector<1x32x1xf32> to vector<1x32x16xf32>
    %16 = arith.addf %13, %15 : vector<1x32x16xf32>
    %c0_10 = arith.constant 0 : index
    %c0_11 = arith.constant 0 : index
    %c0_12 = arith.constant 0 : index
    %17 = vector.load %arg5[%c0_10, %c0_11, %c0_12] : memref<1x32x16xf32, #tpu.memory_space<vmem>>, vector<1x32x16xf32>
    tpu.vector_store %arg5[%c0_10, %c0_11, %c0_12], %16 {strides = array<i32>} : memref<1x32x16xf32, #tpu.memory_space<vmem>>, vector<1x32x16xf32>,
    return
  }
  func.func @transform_0(%arg0: i32, %arg1: i32) -> (i32, i32, i32) {
    %c0_i32 = arith.constant 0 : i32
    %c0_i32_0 = arith.constant 0 : i32
    return %arg0, %c0_i32, %arg1 : i32, i32, i32
  }
  func.func @transform_1(%arg0: i32, %arg1: i32) -> (i32, i32, i32) {
    %c0_i32 = arith.constant 0 : i32
    %c0_i32_0 = arith.constant 0 : i32
    %c0_i32_1 = arith.constant 0 : i32
    return %arg0, %c0_i32, %c0_i32_0 : i32, i32, i32
  }
  func.func @transform_2(%arg0: i32, %arg1: i32) -> (i32, i32, i32) {
    %c0_i32 = arith.constant 0 : i32
    %c0_i32_0 = arith.constant 0 : i32
    %c0_i32_1 = arith.constant 0 : i32
    return %arg0, %c0_i32, %c0_i32_0 : i32, i32, i32
  }
  func.func @transform_3(%arg0: i32, %arg1: i32) -> (i32, i32, i32) {
    %c0_i32 = arith.constant 0 : i32
    %c0_i32_0 = arith.constant 0 : i32
    return %arg0, %c0_i32, %arg1 : i32, i32, i32
  }
}

</mosaic_0001>

<llo_original>
// kernel: tpu_custom_call.1
$region0: #{tpu_custom_call.1}
  #allocation0 [shape = 'u32[]', space=smem, size = 0x4, offset = 0x4, fixed_abs, tag = 'smem constant byte address 0x4 - core index']
  #allocation1 [shape = 'u32[144,128]{1,0:T(1,128)}', space=vmem, size = 0x12000, scoped, tag = 'internal scratch']
  %s0 = inlined_call_operand.vmem [shape: f32[2,32,16], index: 0, kind: input, shape index: {}]
  %s1 = inlined_call_operand.vmem [shape: f32[2,32,1], index: 1, kind: input, shape index: {}]
  %s2 = inlined_call_operand.vmem [shape: f32[2,32,1], index: 2, kind: input, shape index: {}]
  %s3 = inlined_call_operand.vmem [shape: f32[2,32,16], index: 3, kind: output, shape index: {}]
  %s4 = sld [smem:[#allocation0]]
  $region45: #{tpu_custom_call.1} parent=0
    _
  %s6 = ssub.s32 1, %s4
  %s7 = scalar_select 0, %s6, %s4
  loop: start=0, step=1, limit=4
  $region2: #{tpu_custom_call.1} parent=0 // loop_pre_header
    _
  $region3: #{tpu_custom_call.1} parent=0 // loop_header
    %s9 = sphi 0, %s13
    %p10 = scmp.ge.s32.totalorder %s9, 4
    %s16 = sphi 0, %s28
    %s17 = sphi 0, %s24
    %s18 = sphi 0, %s16
    %s19 = sphi 0, %s17
    %s20 = sphi 0, %s18
    %s21 = sphi 0, %s19
    %s33 = sphi 0, %s35
    %s36 = sphi 0, %s33
    %s37 = sphi 0, %s36
    %s53 = sphi 0, %s37
    %s59 = sphi 0, %s61
    %s62 = sphi 0, %s59
    %s63 = sphi 0, %s62
    %s79 = sphi 0, %s63
    %s85 = sphi 0, %s87
    %s88 = sphi 0, %s85
    %s89 = sphi 0, %s88
    %s105 = sphi 0, %s89
    %s113 = sphi 0, %s115
    %s116 = sphi 0, %s113
    %s117 = sphi 0, %s116
    %s133 = sphi 0, %s117
  $region4: #{tpu_custom_call.1} parent=0 // loop_header_branch
    %12 = sbr.rel (%p10) target = $region8
  $region5: #{tpu_custom_call.1} parent=0 // loop_body
    %s14 = ssub.s32 %s9, 1
    %s15 = ssub.s32 %s9, 2
    %s22 = sadd.s32 1, %s17
    %p23 = scmp.ge.s32.totalorder %s22, 1
    %s24 = scalar_select %p23, 0, %s22
    %s25 = sadd.s32 1, %s16
    %s26 = scalar_select %p23, %s25, %s16
    %p27 = scmp.ge.s32.totalorder %s26, 2
    %s28 = scalar_select %p27, 0, %s26
    %s29 = ssub.s32 %s16, %s28
    %s30 = ssub.s32 %s17, %s24
    %s31 = sor.u32 %s29, %s30
    %p32 = scmp.eq.s32.totalorder %s31, 0
    %s34 = sadd.s32 %s33, 1
    %s35 = scalar_select %p32, %s33, %s34
    %p38 = pneg %p32
    %p39 = scmp.eq.s32.totalorder %s9, 1
    %p40 = por %p38, %p39
    %p41 = scmp.ne.s32.totalorder %s33, %s36
    %p42 = scmp.eq.s32.totalorder %s9, 0
    %p43 = por %p41, %p42
    %p44 = scmp.ne.s32.totalorder %s33, %s36
    %p45 = scmp.eq.s32.totalorder %s14, 1
    %p46 = por %p44, %p45
    %p47 = scmp.ne.s32.totalorder %s36, %s37
    %p48 = scmp.eq.s32.totalorder %s14, 0
    %p49 = por %p47, %p48
    %p50 = scmp.ne.s32.totalorder %s36, %s37
    %p51 = scmp.eq.s32.totalorder %s15, 1
    %p52 = por %p50, %p51
    %p54 = scmp.ne.s32.totalorder %s37, %s53
    %p55 = scmp.eq.s32.totalorder %s15, 0
    %p56 = por %p54, %p55
    %s57 = ssub.s32 %s16, %s28
    %p58 = scmp.eq.s32.totalorder %s57, 0
    %s60 = sadd.s32 %s59, 1
    %s61 = scalar_select %p58, %s59, %s60
    %p64 = pneg %p58
    %p65 = scmp.eq.s32.totalorder %s9, 1
    %p66 = por %p64, %p65
    %p67 = scmp.ne.s32.totalorder %s59, %s62
    %p68 = scmp.eq.s32.totalorder %s9, 0
    %p69 = por %p67, %p68
    %p70 = scmp.ne.s32.totalorder %s59, %s62
    %p71 = scmp.eq.s32.totalorder %s14, 1
    %p72 = por %p70, %p71
    %p73 = scmp.ne.s32.totalorder %s62, %s63
    %p74 = scmp.eq.s32.totalorder %s14, 0
    %p75 = por %p73, %p74
    %p76 = scmp.ne.s32.totalorder %s62, %s63
    %p77 = scmp.eq.s32.totalorder %s15, 1
    %p78 = por %p76, %p77
    %p80 = scmp.ne.s32.totalorder %s63, %s79
    %p81 = scmp.eq.s32.totalorder %s15, 0
    %p82 = por %p80, %p81
    %s83 = ssub.s32 %s16, %s28
    %p84 = scmp.eq.s32.totalorder %s83, 0
    %s86 = sadd.s32 %s85, 1
    %s87 = scalar_select %p84, %s85, %s86
    %p90 = pneg %p84
    %p91 = scmp.eq.s32.totalorder %s9, 1
    %p92 = por %p90, %p91
    %p93 = scmp.ne.s32.totalorder %s85, %s88
    %p94 = scmp.eq.s32.totalorder %s9, 0
    %p95 = por %p93, %p94
    %p96 = scmp.ne.s32.totalorder %s85, %s88
    %p97 = scmp.eq.s32.totalorder %s14, 1
    %p98 = por %p96, %p97
    %p99 = scmp.ne.s32.totalorder %s88, %s89
    %p100 = scmp.eq.s32.totalorder %s14, 0
    %p101 = por %p99, %p100
    %p102 = scmp.ne.s32.totalorder %s88, %s89
    %p103 = scmp.eq.s32.totalorder %s15, 1
    %p104 = por %p102, %p103
    %p106 = scmp.ne.s32.totalorder %s89, %s105
    %p107 = scmp.eq.s32.totalorder %s15, 0
    %p108 = por %p106, %p107
    %s109 = ssub.s32 %s16, %s28
    %s110 = ssub.s32 %s17, %s24
    %s111 = sor.u32 %s109, %s110
    %p112 = scmp.eq.s32.totalorder %s111, 0
    %s114 = sadd.s32 %s113, 1
    %s115 = scalar_select %p112, %s113, %s114
    %p118 = pneg %p112
    %p119 = scmp.eq.s32.totalorder %s9, 1
    %p120 = por %p118, %p119
    %p121 = scmp.ne.s32.totalorder %s113, %s116
    %p122 = scmp.eq.s32.totalorder %s9, 0
    %p123 = por %p121, %p122
    %p124 = scmp.ne.s32.totalorder %s113, %s116
    %p125 = scmp.eq.s32.totalorder %s14, 1
    %p126 = por %p124, %p125
    %p127 = scmp.ne.s32.totalorder %s116, %s117
    %p128 = scmp.eq.s32.totalorder %s14, 0
    %p129 = por %p127, %p128
    %p130 = scmp.ne.s32.totalorder %s116, %s117
    %p131 = scmp.eq.s32.totalorder %s15, 1
    %p132 = por %p130, %p131
    %p134 = scmp.ne.s32.totalorder %s117, %s133
    %p135 = scmp.eq.s32.totalorder %s15, 0
    %p136 = por %p134, %p135
    %p137 = scmp.le.s32.totalorder 1, %s9
    %p138 = scmp.lt.s32.totalorder %s9, 3
    %p139 = pnand %p137, %p138
    %p140 = pneg %p139
    // Predicated region
    $region9: #{tpu_custom_call.1} parent=5 // pred_check
      _
    $region10: #{tpu_custom_call.1} parent=5 // pred_check_branch
      %142 = sbr.rel (%p139) target = $region12
    $region11: #{tpu_custom_call.1} parent=5 // pred_region
      %s143 = ssub.s32 %s9, 1
    $region12: #{tpu_custom_call.1} parent=5 // pred_fallthru
      _
    %p144 = scmp.lt.s32.totalorder %s9, 2
    // Predicated region
    $region13: #{tpu_custom_call.1} parent=5 // pred_check
      %p145 = pneg %p144
    $region14: #{tpu_custom_call.1} parent=5 // pred_check_branch
      %147 = sbr.rel (%p145) target = $region16
    $region15: #{tpu_custom_call.1} parent=5 // pred_region
      // Predicated region
      $region17: #{tpu_custom_call.1} parent=15 // pred_check
        %p148 = pneg %p43
      $region18: #{tpu_custom_call.1} parent=15 // pred_check_branch
        %150 = sbr.rel (%p148) target = $region20
      $region19: #{tpu_custom_call.1} parent=15 // pred_region
        %p151 = scmp.lt.s32.totalorder %s16, 1
        %s152 = scalar_select %p151, %s16, 1
        %p153 = scmp.lt.s32.totalorder %s17, 0
        %s154 = scalar_select %p153, %s17, 0
        %s155 = smul.addr %s152, 4
        %s156 = sadd.s32 %s154, %s155
        %s157 = smul.addr %s156, 8
        %s158 = scalar_lea.vmem %s0, %s157
      $region20: #{tpu_custom_call.1} parent=15 // pred_fallthru
        _
      // Predicated region
      $region21: #{tpu_custom_call.1} parent=15 // pred_check
        %p159 = pneg %p69
      $region22: #{tpu_custom_call.1} parent=15 // pred_check_branch
        %161 = sbr.rel (%p159) target = $region24
      $region23: #{tpu_custom_call.1} parent=15 // pred_region
        %p162 = scmp.lt.s32.totalorder %s16, 1
        %s163 = scalar_select %p162, %s16, 1
        %s164 = smul.addr %s163, 4
        %s165 = smul.addr %s164, 8
        %s166 = scalar_lea.vmem %s1, %s165
      $region24: #{tpu_custom_call.1} parent=15 // pred_fallthru
        _
      // Predicated region
      $region25: #{tpu_custom_call.1} parent=15 // pred_check
        %p167 = pneg %p95
      $region26: #{tpu_custom_call.1} parent=15 // pred_check_branch
        %169 = sbr.rel (%p167) target = $region28
      $region27: #{tpu_custom_call.1} parent=15 // pred_region
        %p170 = scmp.lt.s32.totalorder %s16, 1
        %s171 = scalar_select %p170, %s16, 1
        %s172 = smul.addr %s171, 4
        %s173 = smul.addr %s172, 8
        %s174 = scalar_lea.vmem %s2, %s173
      $region28: #{tpu_custom_call.1} parent=15 // pred_fallthru
        _
    $region16: #{tpu_custom_call.1} parent=5 // pred_fallthru
      _
    %p175 = scmp.le.s32.totalorder 1, %s9
    %p176 = scmp.lt.s32.totalorder %s9, 3
    %p177 = pnand %p175, %p176
    %p178 = pneg %p177
    // Predicated region
    $region29: #{tpu_custom_call.1} parent=5 // pred_check
      _
    $region30: #{tpu_custom_call.1} parent=5 // pred_check_branch
      %180 = sbr.rel (%p177) target = $region32
    $region31: #{tpu_custom_call.1} parent=5 // pred_region
      %s181 = ssub.s32 %s9, 1
      %p182 = scmp.lt.s32.totalorder %s18, 1
      %s183 = scalar_select %p182, %s18, 1
      %p184 = scmp.lt.s32.totalorder %s19, 0
      %s185 = scalar_select %p184, %s19, 0
      %s186 = smul.addr %s183, 4
      %s187 = sadd.s32 %s185, %s186
      %s188 = smul.addr %s187, 8
      %s189 = scalar_lea.vmem %s0, %s188
      %p190 = pneg %p49
      %p191 = pneg %p46
      %p192 = scmp.lt.s32.totalorder %s18, 1
      %s193 = scalar_select %p192, %s18, 1
      %s194 = smul.addr %s193, 4
      %s195 = smul.addr %s194, 8
      %s196 = scalar_lea.vmem %s1, %s195
      %p197 = pneg %p75
      %p198 = pneg %p72
      %p199 = scmp.lt.s32.totalorder %s18, 1
      %s200 = scalar_select %p199, %s18, 1
      %s201 = smul.addr %s200, 4
      %s202 = smul.addr %s201, 8
      %s203 = scalar_lea.vmem %s2, %s202
      %p204 = pneg %p101
      %p205 = pneg %p98
      %p206 = pneg %p129
      %p207 = pneg %p126
      %p208 = scmp.lt.s32.totalorder %s18, 1
      %s209 = scalar_select %p208, %s18, 1
      %p210 = scmp.lt.s32.totalorder %s19, 0
      %s211 = scalar_select %p210, %s19, 0
      %s212 = smul.addr %s209, 4
      %s213 = sadd.s32 %s211, %s212
      %s214 = smul.addr %s213, 8
      %s215 = scalar_lea.vmem %s3, %s214
      %p216 = scmp.lt.s32.totalorder %s18, 1
      %s217 = scalar_select %p216, %s18, 1
      %p218 = scmp.lt.s32.totalorder %s19, 0
      %s219 = scalar_select %p218, %s19, 0
      %s220 = smul.addr %s217, 4
      %s221 = sadd.s32 %s219, %s220
      %s222 = smul.addr %s221, 8
      %s223 = scalar_lea.vmem %s0, %s222
      %p224 = scmp.lt.s32.totalorder %s18, 1
      %s225 = scalar_select %p224, %s18, 1
      %s226 = smul.addr %s225, 4
      %s227 = smul.addr %s226, 8
      %s228 = scalar_lea.vmem %s1, %s227
      %p229 = scmp.lt.s32.totalorder %s18, 1
      %s230 = scalar_select %p229, %s18, 1
      %s231 = smul.addr %s230, 4
      %s232 = smul.addr %s231, 8
      %s233 = scalar_lea.vmem %s2, %s232
      %p234 = scmp.lt.s32.totalorder %s18, 1
      %s235 = scalar_select %p234, %s18, 1
      %p236 = scmp.lt.s32.totalorder %s19, 0
      %s237 = scalar_select %p236, %s19, 0
      %s238 = smul.addr %s235, 4
      %s239 = sadd.s32 %s237, %s238
      %s240 = smul.addr %s239, 8
      %s241 = scalar_lea.vmem %s3, %s240
      %v242 = vld [vmem:[%s223] sm:$0xff]
      %v243 = vld [vmem:[%s223 + $0x8] sm:$0xff]
      %v244 = vld [vmem:[%s223 + $0x10] sm:$0xff]
      %v245 = vld [vmem:[%s223 + $0x18] sm:$0xff]
      %v246 = vmul.f32 %v242, %v242
      %v247 = vmul.f32 %v243, %v243
      %v248 = vmul.f32 %v244, %v244
      %v249 = vmul.f32 %v245, %v245
      %vm250 = vcmask 130048
      %v251 = vsel %vm250, %v246, 0.0
      %v252 = vsel %vm250, %v247, 0.0
      %v253 = vadd.f32 %v251, %v252
      %v254 = vsel %vm250, %v248, 0.0
      %v255 = vadd.f32 %v253, %v254
      %v256 = vsel %vm250, %v249, 0.0
      %v257 = vadd.f32 %v255, %v256
      %v258 = vrot.slane %v257, 4
      %v259 = vadd.f32 %v257, %v258
      %v260 = vrot.slane %v259, 2
      %v261 = vadd.f32 %v259, %v260
      %v262 = vrot.slane %v261, 1
      %v263 = vadd.f32 %v261, %v262
      %v264 = vmul.f32 %v263, 0.03125
      %v265 = vadd.f32 %v264, 1e-06
      %v266 = vrsqrt.pop %v265
      %v267 = vmul.f32 %v242, %v266
      %v268 = vmul.f32 %v243, %v266
      %v269 = vmul.f32 %v244, %v266
      %v270 = vmul.f32 %v245, %v266
      %v271 = vld [vmem:[%s228] sm:$0xff]
      %v272 = vld [vmem:[%s228 + $0x8] sm:$0xff]
      %v273 = vld [vmem:[%s228 + $0x10] sm:$0xff]
      %v274 = vld [vmem:[%s228 + $0x18] sm:$0xff]
      %276 = vset.pattern.permute.xlu0 0
      %277 = vperm.xlu0 %276, %v271
      %v278 = vpop.permute.xlu0 %277
      %281 = vset.pattern.permute.xlu0 0
      %282 = vperm.xlu0 %281, %v272
      %v283 = vpop.permute.xlu0 %282
      %286 = vset.pattern.permute.xlu0 0
      %287 = vperm.xlu0 %286, %v273
      %v288 = vpop.permute.xlu0 %287
      %291 = vset.pattern.permute.xlu0 0
      %292 = vperm.xlu0 %291, %v274
      %v293 = vpop.permute.xlu0 %292
      %v295 = vmul.f32 %v278, %v267
      %v296 = vmul.f32 %v283, %v268
      %v297 = vmul.f32 %v288, %v269
      %v298 = vmul.f32 %v293, %v270
      %v299 = vld [vmem:[%s233] sm:$0xff]
      %v300 = vld [vmem:[%s233 + $0x8] sm:$0xff]
      %v301 = vld [vmem:[%s233 + $0x10] sm:$0xff]
      %v302 = vld [vmem:[%s233 + $0x18] sm:$0xff]
      %304 = vset.pattern.permute.xlu0 0
      %305 = vperm.xlu0 %304, %v299
      %v306 = vpop.permute.xlu0 %305
      %309 = vset.pattern.permute.xlu0 0
      %310 = vperm.xlu0 %309, %v300
      %v311 = vpop.permute.xlu0 %310
      %314 = vset.pattern.permute.xlu0 0
      %315 = vperm.xlu0 %314, %v301
      %v316 = vpop.permute.xlu0 %315
      %319 = vset.pattern.permute.xlu0 0
      %320 = vperm.xlu0 %319, %v302
      %v321 = vpop.permute.xlu0 %320
      %v323 = vadd.f32 %v295, %v306
      %v324 = vadd.f32 %v296, %v311
      %v325 = vadd.f32 %v297, %v316
      %v326 = vadd.f32 %v298, %v321
      %327 = vst.msk [vmem:[%s241] sm:$0xff] %vm250, %v323
      %328 = vst.msk [vmem:[%s241 + $0x8] sm:$0xff] %vm250, %v324
      %329 = vst.msk [vmem:[%s241 + $0x10] sm:$0xff] %vm250, %v325
      %330 = vst.msk [vmem:[%s241 + $0x18] sm:$0xff] %vm250, %v326
      %p331 = scmp.lt.s32.totalorder %s18, 1
      %s332 = scalar_select %p331, %s18, 1
      %p333 = scmp.lt.s32.totalorder %s19, 0
      %s334 = scalar_select %p333, %s19, 0
      %s335 = smul.addr %s332, 4
      %s336 = sadd.s32 %s334, %s335
      %s337 = smul.addr %s336, 8
      %s338 = scalar_lea.vmem %s3, %s337
      // Predicated region
      $region33: #{tpu_custom_call.1} parent=31 // pred_check
        %p339 = pneg %p126
      $region34: #{tpu_custom_call.1} parent=31 // pred_check_branch
        %341 = sbr.rel (%p339) target = $region36
      $region35: #{tpu_custom_call.1} parent=31 // pred_region
        _
      $region36: #{tpu_custom_call.1} parent=31 // pred_fallthru
        _
    $region32: #{tpu_custom_call.1} parent=5 // pred_fallthru
      _
    %p342 = scmp.le.s32.totalorder 2, %s9
    // Predicated region
    $region37: #{tpu_custom_call.1} parent=5 // pred_check
      %p343 = pneg %p342
    $region38: #{tpu_custom_call.1} parent=5 // pred_check_branch
      %345 = sbr.rel (%p343) target = $region40
    $region39: #{tpu_custom_call.1} parent=5 // pred_region
      %s346 = ssub.s32 %s9, 2
      // Predicated region
      $region41: #{tpu_custom_call.1} parent=39 // pred_check
        %p347 = pneg %p132
      $region42: #{tpu_custom_call.1} parent=39 // pred_check_branch
        %349 = sbr.rel (%p347) target = $region44
      $region43: #{tpu_custom_call.1} parent=39 // pred_region
        %p350 = scmp.lt.s32.totalorder %s20, 1
        %s351 = scalar_select %p350, %s20, 1
        %p352 = scmp.lt.s32.totalorder %s21, 0
        %s353 = scalar_select %p352, %s21, 0
        %s354 = smul.addr %s351, 4
        %s355 = sadd.s32 %s353, %s354
        %s356 = smul.addr %s355, 8
        %s357 = scalar_lea.vmem %s3, %s356
      $region44: #{tpu_custom_call.1} parent=39 // pred_fallthru
        _
    $region40: #{tpu_custom_call.1} parent=5 // pred_fallthru
      _
  $region6: #{tpu_custom_call.1} parent=0 // loop_footer
    %s13 = sadd.s32 1, %s9
  $region7: #{tpu_custom_call.1} parent=0 // loop_footer_branch
    %8 = sbr.rel target = $region3
  $region8: #{tpu_custom_call.1} parent=0 // loop_exit
    _

</llo_original>
